<compile_context>
chip_gen: v7x
topology: tpu7x:2x2x1
jax: 0.10.0
libtpu: 0.0.40
codegen_flags: <defaults>
</compile_context>

<pallas_src>
import math

import jax
import jax.numpy as jnp
from jax.experimental import pallas as pl
from jax.experimental.pallas import tpu as pltpu


# ---------------------------------------------------------------------------
# Per-generation VMEM sizing
# ---------------------------------------------------------------------------
_VMEM_LIMIT_CACHE = None


def _vmem_limit_bytes():
    """Scoped-VMEM limit: ~3/4 of physical VMEM, capped at 64 MiB.
    v7x (64 MiB physical) -> 48 MiB; v5e/v6e (128 MiB) -> 64 MiB."""
    global _VMEM_LIMIT_CACHE
    if _VMEM_LIMIT_CACHE is None:
        cap = 0
        try:
            cap = int(pltpu.get_tpu_info().vmem_capacity_bytes)
        except Exception:
            cap = 0
        if cap <= 0:
            cap = 64 * 1024 * 1024          # conservative fallback (v7x per-TC VMEM)
        _VMEM_LIMIT_CACHE = min(64 * 1024 * 1024, (cap * 3) // 4)
    return _VMEM_LIMIT_CACHE


# ---------------------------------------------------------------------------
# Kernels
# ---------------------------------------------------------------------------
def _make_energy_kernel(chunk_rows):
    def _energy_kernel(q_ref, enc_ref, out_ref):
        # q_ref  : (TB, H)      query with the scoring weights folded in
        # enc_ref: (TL, TB, H)  encoder tile in its native (L, B, H) layout
        # out_ref: (TB, TL)     energies, lane-dense along L
        q = q_ref[...].astype(jnp.float32)[None, :, :]            # (1, TB, H)
        tl = enc_ref.shape[0]
        # Static chunk loop over L rows: bounds live f32 intermediates to ~1 MiB
        # so the streaming mul+reduce stays in vregs / small scratch while the
        # DMA tile itself can be 12-16 MiB.
        for start in range(0, tl, chunk_rows):
            n = min(chunk_rows, tl - start)
            enc = enc_ref[pl.ds(start, n)].astype(jnp.float32)    # (n, TB, H)
            e_lb = jnp.sum(enc * q, axis=-1)                      # (n, TB)
            # In-kernel transpose (XLU) -> (TB, n): output emitted in (B, L).
            out_ref[:, pl.ds(start, n)] = e_lb.T
    return _energy_kernel


def _softmax_kernel(e_ref, out_ref):
    """Numerically stable row softmax over the full source length."""
    e = e_ref[...]                                                # (TB, L)
    m = jnp.max(e, axis=-1, keepdims=True)
    p = jnp.exp(e - m)
    s = jnp.sum(p, axis=-1, keepdims=True)
    out_ref[...] = p * (1.0 / s)


# ---------------------------------------------------------------------------
# Tiling helpers + pallas_call wrappers
# ---------------------------------------------------------------------------
def _choose_tb(B, H, itemsize, enc_budget):
    """Batch tile: the full batch when small, else a small multiple of 8 (ideally
    dividing B); never a huge full-B tile that would blow the enc tile budget."""
    if B <= 64:
        tb = B                                   # full extent is always a legal block dim
    else:
        tb = 8
        for cand in (64, 56, 48, 40, 32, 24, 16, 8):
            if B % cand == 0:
                tb = cand
                break
    # If even an 8-row slab of L would exceed the per-buffer budget, shrink TB.
    if tb > 8 and tb * 8 * H * itemsize > enc_budget:
        tb = 8
    return tb


def _energies(q, enc):
    """energies[b, l] = enc[l, b, :] . q[b, :]  — enc streamed in its native
    (L, B, H) layout, output emitted directly in (B, L) layout."""
    L, B, H = enc.shape
    itemsize = jnp.dtype(enc.dtype).itemsize
    vlimit = _vmem_limit_bytes()
    enc_budget = vlimit // 4                 # per-buffer enc tile; x2 buffers ~ half the limit

    TB = _choose_tb(B, H, itemsize, enc_budget)

    # L tile is the lane dim of the (B, L) output block: multiple of 128 or full L.
    max_tl = max(1, enc_budget // (TB * H * itemsize))
    if max_tl >= L:
        TL = L
    else:
        TL = min(L, max(128, (max_tl // 128) * 128))

    n_b = pl.cdiv(B, TB)
    # v7x has 2 TensorCores: keep >= 2 blocks along a parallel axis when possible.
    if n_b == 1 and TL == L and L >= 256:
        TL = max(128, (pl.cdiv(L, 2) // 128) * 128)
    n_l = pl.cdiv(L, TL)

    # In-kernel chunk (rows of L) bounding live f32 intermediates to ~1 MiB.
    chunk = max(8, ((1 << 20) // max(1, TB * H * 4)) // 8 * 8)
    chunk = min(chunk, TL)

    return pl.pallas_call(
        _make_energy_kernel(chunk),
        out_shape=jax.ShapeDtypeStruct((B, L), jnp.float32),
        grid=(n_b, n_l),
        in_specs=[
            # q tile is constant along the inner L axis -> fetched once per B tile.
            pl.BlockSpec((TB, H), lambda i, j: (i, 0)),
            # encoder_outputs consumed in its original (L, B, H) layout (no HBM transpose).
            pl.BlockSpec((TL, TB, H), lambda i, j: (j, i, 0)),
        ],
        out_specs=pl.BlockSpec((TB, TL), lambda i, j: (i, j)),
        compiler_params=pltpu.CompilerParams(
            dimension_semantics=("parallel", "parallel"),
            vmem_limit_bytes=vlimit,
        ),
    )(q, enc)


def _softmax_rows(energies_bl):
    """Softmax over the last dim of (B, L) energies, batch tile sized from VMEM."""
    B, L = energies_bl.shape
    vlimit = _vmem_limit_bytes()
    # in + out blocks, each double-buffered: 4 * TB * L * 4 bytes under ~half the limit.
    max_tb = max(1, (vlimit // 2) // (4 * L * 4))
    if max_tb >= B:
        TB = B
    else:
        TB = max(8, (max_tb // 8) * 8)
    grid = (pl.cdiv(B, TB),)
    return pl.pallas_call(
        _softmax_kernel,
        out_shape=jax.ShapeDtypeStruct((B, L), jnp.float32),
        grid=grid,
        in_specs=[pl.BlockSpec((TB, L), lambda i: (i, 0))],
        out_specs=pl.BlockSpec((TB, L), lambda i: (i, 0)),
        compiler_params=pltpu.CompilerParams(
            dimension_semantics=("parallel",),
            vmem_limit_bytes=vlimit,
        ),
    )(energies_bl)


# ---------------------------------------------------------------------------
# Module wrapper (parameter setup + weight folding in plain JAX)
# ---------------------------------------------------------------------------
class AttnPallas:
    def __init__(self, method, hidden_size, key):
        self.method = method
        self.hidden_size = hidden_size
        H = hidden_size
        if method == 'general':
            k_w, k_b = jax.random.split(key, 2)
            bound = 1.0 / math.sqrt(H)
            self.attn_w = jax.random.uniform(k_w, (H, H), jnp.float32, -bound, bound)
            self.attn_b = jax.random.uniform(k_b, (1, H), jnp.float32, -bound, bound)
        elif method == 'concat':
            k_w, k_b, k_v = jax.random.split(key, 3)
            bound = 1.0 / math.sqrt(2 * H)
            self.attn_w = jax.random.uniform(k_w, (H, 2 * H), jnp.float32, -bound, bound)
            self.attn_b = jax.random.uniform(k_b, (1, H), jnp.float32, -bound, bound)
            # torch.FloatTensor(1, H) is uninitialized; use a deterministic normal init.
            self.v = jax.random.normal(k_v, (1, H), jnp.float32)
        self._fwd = jax.jit(self._forward)

    def _forward(self, hidden, encoder_outputs):
        # hidden: (1, B, H), encoder_outputs: (L, B, H)  — PyTorch layout; the big
        # tensor is NOT transposed or cast in the wrapper (bf16 enc streams as-is).
        H = self.hidden_size
        h = hidden[0].astype(jnp.float32)            # (B, H)
        enc = encoder_outputs                        # (L, B, H)
        L, B, _ = enc.shape

        # Fold the scoring weights into a per-batch query q:
        #   energy[b, l] = enc[l, b, :] . q[b, :]  (+ per-batch constant, which is
        #   constant along L and therefore cancels in the softmax -> dropped).
        if self.method == 'dot':
            q = h
        elif self.method == 'general':
            # nn.Linear: attn(e) = e @ W.T + bias  =>  h.attn(e) = e.(h@W) + h.bias
            q = h @ self.attn_w                                     # (B, H)
        elif self.method == 'concat':
            we = self.attn_w[:, H:]                                 # encoder half of W
            # v.attn(cat(h,e)) = e.(v@We) + v.(h@Wh.T + bias)
            q = jnp.broadcast_to((self.v[0] @ we)[None, :], (B, H))  # (B, H)
        else:
            raise ValueError(self.method)

        energies_bl = _energies(q, enc)              # (B, L) — streaming Pallas pass
        attn = _softmax_rows(energies_bl)            # (B, L) — Pallas row softmax
        # F.softmax(energies, dim=1).unsqueeze(1) -> (B, 1, L)
        return attn[:, None, :]

    def __call__(self, hidden, encoder_outputs):
        return self._fwd(hidden, encoder_outputs)


# ---------------------------------------------------------------------------
# Pure-JAX reference (mirrors the PyTorch loops, vectorized) for validation
# ---------------------------------------------------------------------------
def _reference(module, hidden, encoder_outputs):
    H = module.hidden_size
    h = hidden[0]                                        # (B, H)
    enc = jnp.transpose(encoder_outputs, (1, 0, 2))      # (B, L, H)
    if module.method == 'dot':
        energy = jnp.einsum('bh,blh->bl', h, enc)
    elif module.method == 'general':
        proj = jnp.einsum('blh,oh->blo', enc, module.attn_w) + module.attn_b[0]
        energy = jnp.einsum('bh,blh->bl', h, proj)
    elif module.method == 'concat':
        wh, we = module.attn_w[:, :H], module.attn_w[:, H:]
        proj = (jnp.einsum('bh,oh->bo', h, wh)[:, None, :]
                + jnp.einsum('blh,oh->blo', enc, we) + module.attn_b[0])
        energy = jnp.einsum('h,blh->bl', module.v[0], proj)
    sm = jax.nn.softmax(energy, axis=1)
    return sm[:, None, :]


if __name__ == "__main__":
    key = jax.random.PRNGKey(0)
    k_h, k_e, k_p1, k_p2, k_p3 = jax.random.split(key, 5)

    ok = True

    # Small primary shapes (single-block path), all three scoring methods.
    B, L, H = 2, 8, 32
    hidden = jax.random.normal(k_h, (1, B, H), jnp.float32)           # (1, B, H)
    encoder_outputs = jax.random.normal(k_e, (L, B, H), jnp.float32)  # (L, B, H)
    for method, pkey in (('dot', k_p1), ('general', k_p2), ('concat', k_p3)):
        mod = AttnPallas(method, H, pkey)
        out = jax.block_until_ready(mod(hidden, encoder_outputs))
        ref = _reference(mod, hidden, encoder_outputs)
        if out.shape != (B, 1, L):
            ok = False
        if not jnp.allclose(out, ref, atol=1e-5, rtol=1e-5):
            ok = False

    # Slightly larger shape exercising the multi-block grid along L and the
    # ragged-edge (cdiv) masking of the last L block.
    B2, L2, H2 = 12, 320, 64
    k_h2, k_e2, k_p4 = jax.random.split(k_e, 3)
    hidden2 = jax.random.normal(k_h2, (1, B2, H2), jnp.float32)
    enc2 = jax.random.normal(k_e2, (L2, B2, H2), jnp.float32)
    mod2 = AttnPallas('general', H2, k_p4)
    out2 = jax.block_until_ready(mod2(hidden2, enc2))
    ref2 = _reference(mod2, hidden2, enc2)
    if out2.shape != (B2, 1, L2) or not jnp.allclose(out2, ref2, atol=1e-5, rtol=1e-5):
        ok = False

    if ok:
        print("KERNEL_OK")
</pallas_src>

<mosaic_0001>
module attributes {stable_mosaic.version = 11 : i64} {
  func.func @_softmax_kernel(%arg0: i32, %arg1: memref<2x8xf32, #tpu.memory_space<vmem>>, %arg2: memref<2x8xf32, #tpu.memory_space<vmem>>) attributes {dimension_semantics = [#tpu.dimension_semantics<parallel>], iteration_bounds = array<i64: 1>, scalar_prefetch = 0 : i64, scratch_operands = 0 : i64, tpu.core_type = #tpu.core_type<tc>, window_params = [{transform_indices = @transform_0, window_bounds = array<i64: 2, 8>}, {transform_indices = @transform_1, window_bounds = array<i64: 2, 8>}]} {
    %c0 = arith.constant 0 : index
    %c0_0 = arith.constant 0 : index
    %0 = vector.load %arg1[%c0, %c0_0] : memref<2x8xf32, #tpu.memory_space<vmem>>, vector<2x8xf32>
    %cst = arith.constant dense<0xFF800000> : vector<2xf32>
    %1 = vector.multi_reduction <maximumf>, %0, %cst [1] : vector<2x8xf32> to vector<2xf32>
    %2 = vector.shape_cast %1 : vector<2xf32> to vector<2x1xf32>
    %3 = vector.broadcast %2 : vector<2x1xf32> to vector<2x8xf32>
    %4 = arith.subf %0, %3 : vector<2x8xf32>
    %5 = math.exp %4 : vector<2x8xf32>
    %cst_1 = arith.constant dense<0.000000e+00> : vector<2xf32>
    %6 = vector.multi_reduction <add>, %5, %cst_1 [1] : vector<2x8xf32> to vector<2xf32>
    %7 = vector.shape_cast %6 : vector<2xf32> to vector<2x1xf32>
    %cst_2 = arith.constant 1.000000e+00 : f32
    %8 = vector.broadcast %cst_2 : f32 to vector<2x1xf32>
    %9 = arith.divf %8, %7 : vector<2x1xf32>
    %10 = vector.broadcast %9 : vector<2x1xf32> to vector<2x8xf32>
    %11 = arith.mulf %5, %10 : vector<2x8xf32>
    %c0_3 = arith.constant 0 : index
    %c0_4 = arith.constant 0 : index
    %12 = vector.load %arg2[%c0_3, %c0_4] : memref<2x8xf32, #tpu.memory_space<vmem>>, vector<2x8xf32>
    tpu.vector_store %arg2[%c0_3, %c0_4], %11 {strides = array<i32>} : memref<2x8xf32, #tpu.memory_space<vmem>>, vector<2x8xf32>,
    return
  }
  func.func @transform_0(%arg0: i32) -> (i32, i32) {
    %c0_i32 = arith.constant 0 : i32
    %c0_i32_0 = arith.constant 0 : i32
    return %arg0, %c0_i32 : i32, i32
  }
  func.func @transform_1(%arg0: i32) -> (i32, i32) {
    %c0_i32 = arith.constant 0 : i32
    %c0_i32_0 = arith.constant 0 : i32
    return %arg0, %c0_i32 : i32, i32
  }
}

module attributes {stable_mosaic.version = 11 : i64} {
  func.func @_energy_kernel(%arg0: i32, %arg1: i32, %arg2: memref<2x32xf32, #tpu.memory_space<vmem>>, %arg3: memref<8x2x32xf32, #tpu.memory_space<vmem>>, %arg4: memref<2x8xf32, #tpu.memory_space<vmem>>) attributes {dimension_semantics = [#tpu.dimension_semantics<parallel>, #tpu.dimension_semantics<parallel>], iteration_bounds = array<i64: 1, 1>, scalar_prefetch = 0 : i64, scratch_operands = 0 : i64, tpu.core_type = #tpu.core_type<tc>, window_params = [{transform_indices = @transform_0, window_bounds = array<i64: 2, 32>}, {transform_indices = @transform_1, window_bounds = array<i64: 8, 2, 32>}, {transform_indices = @transform_2, window_bounds = array<i64: 2, 8>}]} {
    %c0 = arith.constant 0 : index
    %c0_0 = arith.constant 0 : index
    %0 = vector.load %arg2[%c0, %c0_0] : memref<2x32xf32, #tpu.memory_space<vmem>>, vector<2x32xf32>
    %1 = vector.shape_cast %0 : vector<2x32xf32> to vector<1x2x32xf32>
    %c0_1 = arith.constant 0 : index
    %c0_2 = arith.constant 0 : index
    %c0_3 = arith.constant 0 : index
    %2 = vector.load %arg3[%c0_1, %c0_2, %c0_3] : memref<8x2x32xf32, #tpu.memory_space<vmem>>, vector<8x2x32xf32>
    %3 = vector.broadcast %1 : vector<1x2x32xf32> to vector<8x2x32xf32>
    %4 = arith.mulf %2, %3 : vector<8x2x32xf32>
    %cst = arith.constant dense<0.000000e+00> : vector<8x2xf32>
    %5 = vector.multi_reduction <add>, %4, %cst [2] : vector<8x2x32xf32> to vector<8x2xf32>
    %6 = tpu.transpose %5, [1, 0] : vector<8x2xf32> -> vector<2x8xf32>
    %c0_4 = arith.constant 0 : index
    %c0_5 = arith.constant 0 : index
    %7 = vector.load %arg4[%c0_4, %c0_5] : memref<2x8xf32, #tpu.memory_space<vmem>>, vector<2x8xf32>
    tpu.vector_store %arg4[%c0_4, %c0_5], %6 {strides = array<i32>} : memref<2x8xf32, #tpu.memory_space<vmem>>, vector<2x8xf32>,
    return
  }
  func.func @transform_0(%arg0: i32, %arg1: i32) -> (i32, i32) {
    %c0_i32 = arith.constant 0 : i32
    %c0_i32_0 = arith.constant 0 : i32
    return %arg0, %c0_i32 : i32, i32
  }
  func.func @transform_1(%arg0: i32, %arg1: i32) -> (i32, i32, i32) {
    %c0_i32 = arith.constant 0 : i32
    %c0_i32_0 = arith.constant 0 : i32
    return %arg1, %arg0, %c0_i32 : i32, i32, i32
  }
  func.func @transform_2(%arg0: i32, %arg1: i32) -> (i32, i32) {
    %c0_i32 = arith.constant 0 : i32
    return %arg0, %arg1 : i32, i32
  }
}

</mosaic_0001>

<llo_original>
// kernel: _forward.2
$region0: #{_forward.2}
  #allocation0 [shape = 'u32[]', space=smem, size = 0x4, offset = 0x4, fixed_abs, tag = 'smem constant byte address 0x4 - core index']
  #allocation1 [shape = 'u32[144,128]{1,0:T(1,128)}', space=vmem, size = 0x12000, scoped, tag = 'internal scratch']
  %s0 = inlined_call_operand.vmem [shape: f32[2,32], index: 0, kind: input, shape index: {}]
  %s1 = inlined_call_operand.hbm [shape: f32[8,2,32], index: 1, kind: input, shape index: {}]
  %s2 = inlined_call_operand.vmem [shape: f32[2,8], index: 2, kind: output, shape index: {}]
  %s3 = sld [smem:[#allocation0]]
  $region22: #{_forward.2} parent=0
    _
  %s5 = ssub.s32 1, %s3
  %s6 = scalar_select 0, %s5, %s3
  $region1: #{_forward.2} parent=0
    #allocation2 [shape = 'u8[8192]{0}', space=vmem, size = 0x2000, scoped, tag = 'input window, operand 1, single buffered']
    #allocation3 [shape = 's32[1]{0}', space=sflag, size = 0x4, scoped, tag = 'scoped memory for _forward.2']
    %7 = vsyncpa [#allocation3], 0
    // Predicated region
    $region2: #{_forward.2} parent=1 // pred_check
      _
    $region3: #{_forward.2} parent=1 // pred_check_branch
      %9 = sbr.rel (0) target = $region5
    $region4: #{_forward.2} parent=1 // pred_region
      _
    $region5: #{_forward.2} parent=1 // pred_fallthru
      _
    // Predicated region
    $region6: #{_forward.2} parent=1 // pred_check
      _
    $region7: #{_forward.2} parent=1 // pred_check_branch
      %11 = sbr.rel (0) target = $region9
    $region8: #{_forward.2} parent=1 // pred_region
      %s13 = ssub.s32 256, 256
      %14 = vsyncadd [#allocation3], %s13
      %s15 = sshll.u32 [#allocation2], 4
      %s16 = int_to_ptr.vmem [resolvable:$true] %s15
      %21 = dma.hbm_to_vmem [thread:$0]  %s1, 256, %s16, [#allocation3], 32, 32, 2
    $region9: #{_forward.2} parent=1 // pred_fallthru
      _
    // Predicated region
    $region10: #{_forward.2} parent=1 // pred_check
      _
    $region11: #{_forward.2} parent=1 // pred_check_branch
      %23 = sbr.rel (0) target = $region13
    $region12: #{_forward.2} parent=1 // pred_region
      %24 = dma.done [#allocation3], 256
    $region13: #{_forward.2} parent=1 // pred_fallthru
      _
    %v25 = vld [vmem:[%s0] sm:$0x3]
    %v26 = vld [vmem:[#allocation2] sm:$0x3]
    %v27 = vld [vmem:[#allocation2 + $0x2] sm:$0x3]
    %v28 = vld [vmem:[#allocation2 + $0x4] sm:$0x3]
    %v29 = vld [vmem:[#allocation2 + $0x6] sm:$0x3]
    %v30 = vld [vmem:[#allocation2 + $0x8] sm:$0x3]
    %v31 = vld [vmem:[#allocation2 + $0xa] sm:$0x3]
    %v32 = vld [vmem:[#allocation2 + $0xc] sm:$0x3]
    %v33 = vld [vmem:[#allocation2 + $0xe] sm:$0x3]
    %v34 = vmul.f32 %v26, %v25
    %v35 = vmul.f32 %v27, %v25
    %v36 = vmul.f32 %v28, %v25
    %v37 = vmul.f32 %v29, %v25
    %v38 = vmul.f32 %v30, %v25
    %v39 = vmul.f32 %v31, %v25
    %v40 = vmul.f32 %v32, %v25
    %v41 = vmul.f32 %v33, %v25
    %vm42 = vcmask 254976
    %v43 = vsel %vm42, %v34, 0.0
    %44 = vadd.xlane.f32.xlu0 %v43
    %v45 = vpop.xlane.xlu0 %44
    %v46 = vsel %vm42, %v35, 0.0
    %47 = vadd.xlane.f32.xlu0 %v46
    %v48 = vpop.xlane.xlu0 %47
    %v49 = vsel %vm42, %v36, 0.0
    %50 = vadd.xlane.f32.xlu0 %v49
    %v51 = vpop.xlane.xlu0 %50
    %v52 = vsel %vm42, %v37, 0.0
    %53 = vadd.xlane.f32.xlu0 %v52
    %v54 = vpop.xlane.xlu0 %53
    %v55 = vsel %vm42, %v38, 0.0
    %56 = vadd.xlane.f32.xlu0 %v55
    %v57 = vpop.xlane.xlu0 %56
    %v58 = vsel %vm42, %v39, 0.0
    %59 = vadd.xlane.f32.xlu0 %v58
    %v60 = vpop.xlane.xlu0 %59
    %v61 = vsel %vm42, %v40, 0.0
    %62 = vadd.xlane.f32.xlu0 %v61
    %v63 = vpop.xlane.xlu0 %62
    %v64 = vsel %vm42, %v41, 0.0
    %65 = vadd.xlane.f32.xlu0 %v64
    %v66 = vpop.xlane.xlu0 %65
    %v75 = vlaneseq
    %v76 = vand.u32 %v75, 127
    %v77 = vlaneseq
    %v78 = vshrl.u32 %v77, 7
    %v79 = vsub.s32 %v76, %v78
    %v80 = vrot.slane %v45, %v79
    %v81 = vlaneseq
    %v82 = vshrl.u32 %v81, 7
    %v83 = vsub.s32 %v76, %v82
    %v84 = vrot.slane %v48, %v83
    %v85 = vlaneseq
    %v86 = vshrl.u32 %v85, 7
    %v87 = vsub.s32 %v76, %v86
    %v88 = vrot.slane %v51, %v87
    %v89 = vlaneseq
    %v90 = vshrl.u32 %v89, 7
    %v91 = vsub.s32 %v76, %v90
    %v92 = vrot.slane %v54, %v91
    %v93 = vlaneseq
    %v94 = vshrl.u32 %v93, 7
    %v95 = vsub.s32 %v76, %v94
    %v96 = vrot.slane %v57, %v95
    %v97 = vlaneseq
    %v98 = vshrl.u32 %v97, 7
    %v99 = vsub.s32 %v76, %v98
    %v100 = vrot.slane %v60, %v99
    %v101 = vlaneseq
    %v102 = vshrl.u32 %v101, 7
    %v103 = vsub.s32 %v76, %v102
    %v104 = vrot.slane %v63, %v103
    %v105 = vlaneseq
    %v106 = vshrl.u32 %v105, 7
    %v107 = vsub.s32 %v76, %v106
    %v108 = vrot.slane %v66, %v107
    %vm109 = vcmask 1041409
    %v110 = vsel %vm109, %v84, %v80
    %vm111 = vcmask 1042434
    %v112 = vsel %vm111, %v88, %v110
    %vm113 = vcmask 1043459
    %v114 = vsel %vm113, %v92, %v112
    %vm115 = vcmask 1044484
    %v116 = vsel %vm115, %v96, %v114
    %vm117 = vcmask 1045509
    %v118 = vsel %vm117, %v100, %v116
    %vm119 = vcmask 1046534
    %v120 = vsel %vm119, %v104, %v118
    %vm121 = vcmask 1047559
    %v122 = vsel %vm121, %v108, %v120
    %124 = vxpose.xlu0.b32.start [1/16] %v122, 128
    %125 = vxpose.xlu0.b32.cont [2/16] 0.0, 128
    %126 = vxpose.xlu0.b32.cont [3/16] 0.0, 128
    %127 = vxpose.xlu0.b32.cont [4/16] 0.0, 128
    %128 = vxpose.xlu0.b32.cont [5/16] 0.0, 128
    %129 = vxpose.xlu0.b32.cont [6/16] 0.0, 128
    %130 = vxpose.xlu0.b32.cont [7/16] 0.0, 128
    %131 = vxpose.xlu0.b32.cont [8/16] 0.0, 128
    %132 = vxpose.xlu0.b32.cont [9/16] 0.0, 128
    %133 = vxpose.xlu0.b32.cont [10/16] 0.0, 128
    %134 = vxpose.xlu0.b32.cont [11/16] 0.0, 128
    %135 = vxpose.xlu0.b32.cont [12/16] 0.0, 128
    %136 = vxpose.xlu0.b32.cont [13/16] 0.0, 128
    %137 = vxpose.xlu0.b32.cont [14/16] 0.0, 128
    %138 = vxpose.xlu0.b32.cont [15/16] 0.0, 128
    %139 = vxpose.xlu0.b32.end [16/16] 0.0, 128
    %v140 = vpop.trf.xlu0
    %v141 = vpop.trf.xlu0
    %v142 = vpop.trf.xlu0
    %v143 = vpop.trf.xlu0
    %v144 = vpop.trf.xlu0
    %v145 = vpop.trf.xlu0
    %v146 = vpop.trf.xlu0
    %v147 = vpop.trf.xlu0
    %v148 = vpop.trf.xlu0
    %v149 = vpop.trf.xlu0
    %v150 = vpop.trf.xlu0
    %v151 = vpop.trf.xlu0
    %v152 = vpop.trf.xlu0
    %v153 = vpop.trf.xlu0
    %v154 = vpop.trf.xlu0
    %v155 = vpop.trf.xlu0
    %vm156 = vcmask 58368
    %157 = vst.msk [vmem:[%s2] sm:$0x3] %vm156, %v140
    // Predicated region
    $region14: #{_forward.2} parent=1 // pred_check
      _
    $region15: #{_forward.2} parent=1 // pred_check_branch
      %159 = sbr.rel (0) target = $region17
    $region16: #{_forward.2} parent=1 // pred_region
      _
    $region17: #{_forward.2} parent=1 // pred_fallthru
      _
    // Predicated region
    $region18: #{_forward.2} parent=1 // pred_check
      _
    $region19: #{_forward.2} parent=1 // pred_check_branch
      %161 = sbr.rel (0) target = $region21
    $region20: #{_forward.2} parent=1 // pred_region
      _
    $region21: #{_forward.2} parent=1 // pred_fallthru
      _
    %162 = vsyncpa [#allocation3], 1

// kernel: _forward.3
$region0: #{_forward.3}
  #allocation0 [shape = 'u32[]', space=smem, size = 0x4, offset = 0x4, fixed_abs, tag = 'smem constant byte address 0x4 - core index']
  #allocation1 [shape = 'u32[144,128]{1,0:T(1,128)}', space=vmem, size = 0x12000, scoped, tag = 'internal scratch']
  %s0 = inlined_call_operand.vmem [shape: f32[2,8], index: 0, kind: input, shape index: {}]
  %s1 = inlined_call_operand.hbm [shape: f32[2,8], index: 1, kind: output, shape index: {}]
  %s2 = sld [smem:[#allocation0]]
  $region14: #{_forward.3} parent=0
    _
  %s4 = ssub.s32 1, %s2
  %s5 = scalar_select 0, %s4, %s2
  $region1: #{_forward.3} parent=0
    #allocation2 [shape = 'u8[1024]{0}', space=vmem, size = 0x400, scoped, tag = 'output window, operand 0, single buffered']
    #allocation3 [shape = 's32[1]{0}', space=sflag, size = 0x4, scoped, tag = 'scoped memory for _forward.3']
    %6 = vsyncpa [#allocation3], 0
    // Predicated region
    $region2: #{_forward.3} parent=1 // pred_check
      _
    $region3: #{_forward.3} parent=1 // pred_check_branch
      %8 = sbr.rel (0) target = $region5
    $region4: #{_forward.3} parent=1 // pred_region
      _
    $region5: #{_forward.3} parent=1 // pred_fallthru
      _
    %v9 = vld [vmem:[%s0] sm:$0x3]
    %vm10 = vcmask 58368
    %v11 = vsel %vm10, %v9, -inf
    %12 = vmax.xlane.f32.xlu0 %v11
    %v13 = vpop.xlane.xlu0 %12
    %v14 = vsub.f32 %v9, %v13
    %v15 = vmul.f32 %v14, 1.442695
    %v16 = vpow.pop %v15
    %v17 = vsel %vm10, %v16, 0.0
    %18 = vadd.xlane.f32.xlu0 %v17
    %v19 = vpop.xlane.xlu0 %18
    %v20 = vrcp.pop %v19
    %v21 = vmul.f32 1.0, %v20
    %v22 = vmul.f32 %v16, %v21
    %23 = vst.msk [vmem:[#allocation2] sm:$0x3] %vm10, %v22
    // Predicated region
    $region6: #{_forward.3} parent=1 // pred_check
      _
    $region7: #{_forward.3} parent=1 // pred_check_branch
      %25 = sbr.rel (0) target = $region9
    $region8: #{_forward.3} parent=1 // pred_region
      %s27 = ssub.s32 32, 32
      %28 = vsyncadd [#allocation3], %s27
      %s30 = sshll.u32 [#allocation2], 4
      %s31 = int_to_ptr.vmem [resolvable:$true] %s30
      %33 = dma.vmem_to_hbm [thread:$0]  %s31, 32, %s1, [#allocation3]
    $region9: #{_forward.3} parent=1 // pred_fallthru
      _
    // Predicated region
    $region10: #{_forward.3} parent=1 // pred_check
      _
    $region11: #{_forward.3} parent=1 // pred_check_branch
      %35 = sbr.rel (0) target = $region13
    $region12: #{_forward.3} parent=1 // pred_region
      %36 = dma.done [#allocation3], 32
    $region13: #{_forward.3} parent=1 // pred_fallthru
      _
    %37 = vsyncpa [#allocation3], 1

</llo_original>
